<compile_context>
chip_gen: v5e
topology: v5e:2x2
jax: 0.10.0
libtpu: 0.0.40
codegen_flags: <defaults>
</compile_context>

<pallas_src>
import functools

import jax
import jax.numpy as jnp
from jax import lax
from jax.experimental import pallas as pl
from jax.experimental.pallas import tpu as pltpu


def _dice_sums_kernel(labels_ref, x_ref, out_ref, inter_acc, denom_acc,
                      *, n_classes, group, hw_r, tile, tiles_per_split,
                      needs_mask):
    s = pl.program_id(0)   # split (CORE_PARALLEL on v7x when n_split > 1)
    b = pl.program_id(1)   # batch (reduction)
    n = pl.program_id(2)   # lane tile within split (reduction)

    @pl.when((b == 0) & (n == 0))
    def _init():
        inter_acc[...] = jnp.zeros_like(inter_acc)
        denom_acc[...] = jnp.zeros_like(denom_acc)

    x = x_ref[...].astype(jnp.float32)        # (C*G, T) probabilities
    lab = labels_ref[...].astype(jnp.int32)   # (G, T) class ids
    CG, T = x.shape

    # One-hot without sublane padding.  Row r of x holds class r // G, HW-chunk
    # r % G.  key[g, q] = lab[g, q] * G + g, replicated C times with a
    # sublane-ALIGNED concat (G == 8), so
    #   onehot[r, q] = (key[r % G, q] == r) == (lab[r % G, q] == r // G).
    if group > 1:
        gidx = lax.broadcasted_iota(jnp.int32, lab.shape, 0)     # (G, T): 0..G-1
        key = lab * group + gidx                                 # (G, T)
        key_full = jnp.concatenate([key] * n_classes, axis=0)    # (C*G, T)
    else:
        key_full = lab                                           # (1, T) broadcast
    row = lax.broadcasted_iota(jnp.int32, (CG, T), 0)            # (C*G, T)
    onehot = key_full == row                                     # (C*G, T) bool

    def _accumulate(oh, xv):
        # inter = sum(x * t); denom = sum(x*x) + sum(t*t)  (one-hot => t*t == t)
        inter_acc[...] += jnp.where(oh, xv, 0.0)
        denom_acc[...] += xv * xv + oh.astype(jnp.float32)

    if not needs_mask:
        # Exact coverage: every tile is fully interior, no masking at all.
        _accumulate(onehot, x)
    else:
        elem_start = (s * tiles_per_split + n) * tile
        is_interior = elem_start + T <= hw_r

        @pl.when(is_interior)
        def _fast():
            _accumulate(onehot, x)

        @pl.when(jnp.logical_not(is_interior))
        def _ragged():
            lane = lax.broadcasted_iota(jnp.int32, (1, T), 1)
            valid = (elem_start + lane) < hw_r               # (1, T)
            # Zero garbage lanes *before* any arithmetic (NaN/Inf safe).
            _accumulate(onehot & valid, jnp.where(valid, x, 0.0))

    @pl.when((b == pl.num_programs(1) - 1) & (n == pl.num_programs(2) - 1))
    def _finalize():
        inter = jnp.sum(inter_acc[...], axis=1, keepdims=True)   # (C*G, 1)
        denom = jnp.sum(denom_acc[...], axis=1, keepdims=True)   # (C*G, 1)
        out_ref[...] = jnp.concatenate([inter, denom], axis=1)   # (C*G, 2)


def dice_loss_pallas(probs, target_labels, *, n_split=1,
                     vmem_budget_bytes=10 * 1024 * 1024, max_tile=None):
    """probs: (B, C, H, W) class probabilities; target_labels: (B, 1, H, W) ids.

    n_split > 1 marks the leading grid axis CORE_PARALLEL (pass 2 on v7x's two
    TensorCores); keep the default 1 on single-TensorCore chips (v5e / v6e).
    """
    B, C, H, W = probs.shape
    assert target_labels.shape == (B, 1, H, W), "target must be (B, 1, H, W)"
    HW = H * W

    # Fold HW chunks into the sublane dim: (C, HW) -> (C*8, HW/8) so vector ops
    # and accumulators carry no sublane padding when C is not a multiple of 8.
    group = 8 if (C % 8 != 0 and HW % 8 == 0) else 1
    CG = C * group
    hw_r = HW // group

    # Layout-preserving reshapes — no HBM copy, no transpose, no pad, no cast.
    x3d = probs.reshape(B, CG, hw_r)
    lab3d = target_labels.reshape(B, group, hw_r)

    # Lane-tile sizing from a dtype/padding-aware VMEM working set:
    # double-buffered inputs + two f32 accumulators, kept under the default
    # scoped-VMEM limit of every TPU generation (v5e 16 MiB, v6e/v7x 32 MiB).
    def _pad_rows(rows, itemsize):
        sub = max(1, 32 // itemsize)          # 8 (f32/i32), 16 (bf16), 32 (i8)
        return -(-rows // sub) * sub

    x_isz = jnp.dtype(probs.dtype).itemsize
    l_isz = jnp.dtype(target_labels.dtype).itemsize
    bytes_per_lane = (2 * _pad_rows(CG, x_isz) * x_isz       # probs, double-buffered
                      + 2 * _pad_rows(group, l_isz) * l_isz  # labels, double-buffered
                      + 2 * _pad_rows(CG, 4) * 4)            # two f32 accumulators
    cap = max(128, (vmem_budget_bytes // bytes_per_lane) // 128 * 128)
    if max_tile is not None:
        cap = min(cap, max(128, (max_tile // 128) * 128))
    tile = hw_r if hw_r <= cap else cap

    total_tiles = -(-hw_r // tile)
    n_split = max(1, min(n_split, total_tiles))
    tiles_per_split = -(-total_tiles // n_split)
    has_ghosts = n_split * tiles_per_split != total_tiles
    needs_mask = n_split * tiles_per_split * tile != hw_r   # ragged or ghost tiles

    kernel = functools.partial(
        _dice_sums_kernel, n_classes=C, group=group, hw_r=hw_r, tile=tile,
        tiles_per_split=tiles_per_split, needs_mask=needs_mask)

    def in_map(s, b, n):
        t = s * tiles_per_split + n
        if has_ghosts:
            # Clamp fully out-of-range tiles of the last split to a legal block;
            # their contribution is masked to zero inside the kernel.
            t = jnp.minimum(t, total_tiles - 1)
        return (b, 0, t)

    split_sem = pltpu.CORE_PARALLEL if n_split > 1 else "arbitrary"

    out = pl.pallas_call(
        kernel,
        out_shape=jax.ShapeDtypeStruct((n_split, CG, 2), jnp.float32),
        grid_spec=pltpu.PrefetchScalarGridSpec(
            num_scalar_prefetch=0,
            grid=(n_split, B, tiles_per_split),
            in_specs=[
                pl.BlockSpec((pl.Squeezed(), group, tile), in_map),   # labels
                pl.BlockSpec((pl.Squeezed(), CG, tile), in_map),      # probabilities
            ],
            out_specs=pl.BlockSpec((pl.Squeezed(), CG, 2), lambda s, b, n: (s, 0, 0)),
            scratch_shapes=[pltpu.VMEM((CG, tile), jnp.float32),
                            pltpu.VMEM((CG, tile), jnp.float32)],
        ),
        compiler_params=pltpu.CompilerParams(
            dimension_semantics=(split_sem, "arbitrary", "arbitrary"),
        ),
    )(lab3d, x3d)

    # Tiny epilogue in plain JAX: combine split/group partial sums, compute dice.
    sums = jnp.sum(out, axis=0).reshape(C, group, 2).sum(axis=1)   # (C, 2)
    inter, denom = sums[:, 0], sums[:, 1]
    smooth = 1e-5
    dice = (2.0 * inter + smooth) / (denom + smooth)
    return jnp.mean(1.0 - dice)            # weight = [1]*C, divided by n_classes


def _dice_loss_ref(probs, target_labels):
    """Pure-JAX reference mirroring the PyTorch module."""
    B, C, H, W = probs.shape
    smooth = 1e-5
    loss = 0.0
    for i in range(C):
        x = probs[:, i].astype(jnp.float32)
        t = (target_labels[:, 0] == i).astype(jnp.float32)
        intersect = jnp.sum(x * t)
        dice = (2.0 * intersect + smooth) / (
            jnp.sum(t * t) + jnp.sum(x * x) + smooth
        )
        loss = loss + (1.0 - dice)
    return loss / C


if __name__ == "__main__":
    key = jax.random.PRNGKey(0)
    k1, k2, k3, k4 = jax.random.split(key, 4)

    # Case 1: small shapes, tile == full HW, sublane-folded (C=4 -> 32 rows).
    B, C, H, W = 2, 4, 16, 16
    probs = jax.nn.softmax(jax.random.normal(k1, (B, C, H, W), jnp.float32), axis=1)
    target = jax.random.randint(k2, (B, 1, H, W), 0, C).astype(jnp.int32)
    loss = jax.block_until_ready(dice_loss_pallas(probs, target))
    ref = jax.block_until_ready(_dice_loss_ref(probs, target))
    assert jnp.allclose(loss, ref, atol=1e-5, rtol=1e-4), (loss, ref)

    # Case 2: forces lane tiling with a ragged last tile (masked slow path).
    B2, C2, H2, W2 = 2, 3, 36, 36
    probs2 = jax.nn.softmax(jax.random.normal(k3, (B2, C2, H2, W2), jnp.float32), axis=1)
    target2 = jax.random.randint(k4, (B2, 1, H2, W2), 0, C2).astype(jnp.int32)
    loss2 = jax.block_until_ready(dice_loss_pallas(probs2, target2, max_tile=128))
    ref2 = jax.block_until_ready(_dice_loss_ref(probs2, target2))
    assert jnp.allclose(loss2, ref2, atol=1e-5, rtol=1e-4), (loss2, ref2)

    print("KERNEL_OK")
</pallas_src>

<mosaic_0001>
module attributes {stable_mosaic.version = 11 : i64} {
  func.func @_dice_sums_kernel(%arg0: i32, %arg1: i32, %arg2: i32, %arg3: memref<1x8x32xi32, #tpu.memory_space<vmem>>, %arg4: memref<1x32x32xf32, #tpu.memory_space<vmem>>, %arg5: memref<1x32x2xf32, #tpu.memory_space<vmem>>, %arg6: memref<32x32xf32, #tpu.memory_space<vmem>>, %arg7: memref<32x32xf32, #tpu.memory_space<vmem>>) attributes {dimension_semantics = [#tpu.dimension_semantics<arbitrary>, #tpu.dimension_semantics<arbitrary>, #tpu.dimension_semantics<arbitrary>], iteration_bounds = array<i64: 1, 2, 1>, scalar_prefetch = 0 : i64, scratch_operands = 2 : i64, tpu.core_type = #tpu.core_type<tc>, window_params = [{transform_indices = @transform_0, window_bounds = array<i64: 1, 8, 32>}, {transform_indices = @transform_1, window_bounds = array<i64: 1, 32, 32>}, {transform_indices = @transform_2, window_bounds = array<i64: 1, 32, 2>}]} {
    %c0_i32 = arith.constant 0 : i32
    %0 = arith.cmpi eq, %arg1, %c0_i32 : i32
    %c0_i32_0 = arith.constant 0 : i32
    %1 = arith.cmpi eq, %arg2, %c0_i32_0 : i32
    %2 = arith.andi %0, %1 : i1
    %3 = arith.extui %2 : i1 to i32
    %c0_i32_1 = arith.constant 0 : i32
    %4 = arith.cmpi ne, %3, %c0_i32_1 : i32
    scf.if %4 {
      %cst_17 = arith.constant 0.000000e+00 : f32
      %33 = vector.broadcast %cst_17 : f32 to vector<32x32xf32>
      %c0_18 = arith.constant 0 : index
      %c0_19 = arith.constant 0 : index
      %34 = vector.load %arg6[%c0_18, %c0_19] : memref<32x32xf32, #tpu.memory_space<vmem>>, vector<32x32xf32>
      tpu.vector_store %arg6[%c0_18, %c0_19], %33 {strides = array<i32>} : memref<32x32xf32, #tpu.memory_space<vmem>>, vector<32x32xf32>,
      %cst_20 = arith.constant 0.000000e+00 : f32
      %35 = vector.broadcast %cst_20 : f32 to vector<32x32xf32>
      %c0_21 = arith.constant 0 : index
      %c0_22 = arith.constant 0 : index
      %36 = vector.load %arg7[%c0_21, %c0_22] : memref<32x32xf32, #tpu.memory_space<vmem>>, vector<32x32xf32>
      tpu.vector_store %arg7[%c0_21, %c0_22], %35 {strides = array<i32>} : memref<32x32xf32, #tpu.memory_space<vmem>>, vector<32x32xf32>,
    } else {
    }
    %c0 = arith.constant 0 : index
    %c0_2 = arith.constant 0 : index
    %c0_3 = arith.constant 0 : index
    %5 = vector.load %arg4[%c0, %c0_2, %c0_3] : memref<1x32x32xf32, #tpu.memory_space<vmem>>, vector<1x32x32xf32>
    %6 = vector.shape_cast %5 : vector<1x32x32xf32> to vector<32x32xf32>
    %c0_4 = arith.constant 0 : index
    %c0_5 = arith.constant 0 : index
    %c0_6 = arith.constant 0 : index
    %7 = vector.load %arg3[%c0_4, %c0_5, %c0_6] : memref<1x8x32xi32, #tpu.memory_space<vmem>>, vector<1x8x32xi32>
    %8 = vector.shape_cast %7 : vector<1x8x32xi32> to vector<8x32xi32>
    %9 = tpu.iota {dimensions = array<i32: 0>} : vector<8x32xi32>
    %c8_i32 = arith.constant 8 : i32
    %10 = vector.broadcast %c8_i32 : i32 to vector<8x32xi32>
    %11 = arith.muli %8, %10 : vector<8x32xi32>
    %12 = arith.addi %11, %9 : vector<8x32xi32>
    %13 = tpu.concatenate %12, %12, %12, %12 in 0 : vector<8x32xi32>, vector<8x32xi32>, vector<8x32xi32>, vector<8x32xi32> -> vector<32x32xi32>
    %14 = tpu.iota {dimensions = array<i32: 0>} : vector<32x32xi32>
    %15 = arith.cmpi eq, %13, %14 : vector<32x32xi32>
    %c0_7 = arith.constant 0 : index
    %c0_8 = arith.constant 0 : index
    %16 = vector.load %arg6[%c0_7, %c0_8] : memref<32x32xf32, #tpu.memory_space<vmem>>, vector<32x32xf32>
    %cst = arith.constant 0.000000e+00 : f32
    %17 = vector.broadcast %cst : f32 to vector<32x32xf32>
    %18 = arith.select %15, %6, %17 : vector<32x32xi1>, vector<32x32xf32>
    %19 = arith.addf %16, %18 : vector<32x32xf32>
    %c0_9 = arith.constant 0 : index
    %c0_10 = arith.constant 0 : index
    %20 = vector.load %arg6[%c0_9, %c0_10] : memref<32x32xf32, #tpu.memory_space<vmem>>, vector<32x32xf32>
    tpu.vector_store %arg6[%c0_9, %c0_10], %19 {strides = array<i32>} : memref<32x32xf32, #tpu.memory_space<vmem>>, vector<32x32xf32>,
    %c0_11 = arith.constant 0 : index
    %c0_12 = arith.constant 0 : index
    %21 = vector.load %arg7[%c0_11, %c0_12] : memref<32x32xf32, #tpu.memory_space<vmem>>, vector<32x32xf32>
    %22 = arith.mulf %6, %6 : vector<32x32xf32>
    %23 = arith.extui %15 : vector<32x32xi1> to vector<32x32xi32>
    %24 = arith.sitofp %23 : vector<32x32xi32> to vector<32x32xf32>
    %25 = arith.addf %22, %24 : vector<32x32xf32>
    %26 = arith.addf %21, %25 : vector<32x32xf32>
    %c0_13 = arith.constant 0 : index
    %c0_14 = arith.constant 0 : index
    %27 = vector.load %arg7[%c0_13, %c0_14] : memref<32x32xf32, #tpu.memory_space<vmem>>, vector<32x32xf32>
    tpu.vector_store %arg7[%c0_13, %c0_14], %26 {strides = array<i32>} : memref<32x32xf32, #tpu.memory_space<vmem>>, vector<32x32xf32>,
    %c1_i32 = arith.constant 1 : i32
    %28 = arith.cmpi eq, %arg1, %c1_i32 : i32
    %c0_i32_15 = arith.constant 0 : i32
    %29 = arith.cmpi eq, %arg2, %c0_i32_15 : i32
    %30 = arith.andi %28, %29 : i1
    %31 = arith.extui %30 : i1 to i32
    %c0_i32_16 = arith.constant 0 : i32
    %32 = arith.cmpi ne, %31, %c0_i32_16 : i32
    scf.if %32 {
      %c0_17 = arith.constant 0 : index
      %c0_18 = arith.constant 0 : index
      %33 = vector.load %arg6[%c0_17, %c0_18] : memref<32x32xf32, #tpu.memory_space<vmem>>, vector<32x32xf32>
      %cst_19 = arith.constant dense<0.000000e+00> : vector<32xf32>
      %34 = vector.multi_reduction <add>, %33, %cst_19 [1] : vector<32x32xf32> to vector<32xf32>
      %35 = vector.shape_cast %34 : vector<32xf32> to vector<32x1xf32>
      %c0_20 = arith.constant 0 : index
      %c0_21 = arith.constant 0 : index
      %36 = vector.load %arg7[%c0_20, %c0_21] : memref<32x32xf32, #tpu.memory_space<vmem>>, vector<32x32xf32>
      %cst_22 = arith.constant dense<0.000000e+00> : vector<32xf32>
      %37 = vector.multi_reduction <add>, %36, %cst_22 [1] : vector<32x32xf32> to vector<32xf32>
      %38 = vector.shape_cast %37 : vector<32xf32> to vector<32x1xf32>
      %39 = tpu.concatenate %35, %38 in 1 : vector<32x1xf32>, vector<32x1xf32> -> vector<32x2xf32>
      %c0_23 = arith.constant 0 : index
      %c0_24 = arith.constant 0 : index
      %c0_25 = arith.constant 0 : index
      %40 = vector.load %arg5[%c0_23, %c0_24, %c0_25] : memref<1x32x2xf32, #tpu.memory_space<vmem>>, vector<1x32x2xf32>
      %41 = vector.shape_cast %40 : vector<1x32x2xf32> to vector<32x2xf32>
      %42 = vector.shape_cast %39 : vector<32x2xf32> to vector<1x32x2xf32>
      tpu.vector_store %arg5[%c0_23, %c0_24, %c0_25], %42 {strides = array<i32>} : memref<1x32x2xf32, #tpu.memory_space<vmem>>, vector<1x32x2xf32>,
    } else {
    }
    return
  }
  func.func @transform_0(%arg0: i32, %arg1: i32, %arg2: i32) -> (i32, i32, i32) {
    %c1_i32 = arith.constant 1 : i32
    %0 = arith.muli %arg0, %c1_i32 : i32
    %1 = arith.addi %0, %arg2 : i32
    %c0_i32 = arith.constant 0 : i32
    %c0_i32_0 = arith.constant 0 : i32
    return %arg1, %c0_i32, %1 : i32, i32, i32
  }
  func.func @transform_1(%arg0: i32, %arg1: i32, %arg2: i32) -> (i32, i32, i32) {
    %c1_i32 = arith.constant 1 : i32
    %0 = arith.muli %arg0, %c1_i32 : i32
    %1 = arith.addi %0, %arg2 : i32
    %c0_i32 = arith.constant 0 : i32
    %c0_i32_0 = arith.constant 0 : i32
    return %arg1, %c0_i32, %1 : i32, i32, i32
  }
  func.func @transform_2(%arg0: i32, %arg1: i32, %arg2: i32) -> (i32, i32, i32) {
    %c0_i32 = arith.constant 0 : i32
    %c0_i32_0 = arith.constant 0 : i32
    %c0_i32_1 = arith.constant 0 : i32
    return %arg0, %c0_i32, %c0_i32_0 : i32, i32, i32
  }
}

</mosaic_0001>

<llo_original>
// kernel: tpu_custom_call.1
$region0: #{tpu_custom_call.1}
  #allocation0 [shape = 'u32[]', space=smem, size = 0x4, offset = 0x4, fixed_abs, tag = 'smem constant byte address 0x4 - core index']
  #allocation1 [shape = 'u32[72,128]{1,0:T(1,128)}', space=vmem, size = 0x9000, scoped, tag = 'internal scratch']
  #allocation2 [shape = 'f32[32,32]{1,0:T(8,128)}', space=vmem, size = 0x4000, scoped, tag = 'scratch operand']
  #allocation3 [shape = 'f32[32,32]{1,0:T(8,128)}', space=vmem, size = 0x4000, scoped, tag = 'scratch operand']
  %s0 = inlined_call_operand.hbm [shape: s32[2,8,32], index: 0, kind: input, shape index: {}]
  %s1 = inlined_call_operand.hbm [shape: f32[2,32,32], index: 1, kind: input, shape index: {}]
  %s2 = inlined_call_operand.vmem [shape: f32[1,32,2], index: 2, kind: output, shape index: {}]
  %s3 = sld [smem:[#allocation0]]
  $region57: #{tpu_custom_call.1} parent=0
    _
  %s5 = ssub.s32 1, %s3
  %s6 = scalar_select 0, %s5, %s3
  $region1: #{tpu_custom_call.1} parent=0
    #allocation4 [shape = 'u8[8192]{0}', space=vmem, size = 0x2000, scoped, tag = 'input window, operand 0']
    #allocation5 [shape = 's32[2]{0}', space=sflag, size = 0x8, scoped, tag = 'scoped memory for tpu_custom_call.1']
    #allocation6 [shape = 'u8[32768]{0}', space=vmem, size = 0x8000, scoped, tag = 'input window, operand 1']
    #allocation7 [shape = 's32[2]{0}', space=sflag, size = 0x8, scoped, tag = 'scoped memory for tpu_custom_call.1']
    %7 = vsyncpa [#allocation5], 0
    %s8 = scalar_lea.sflag [#allocation5], 1
    %9 = vsyncpa %s8, 0
    %10 = vsyncpa [#allocation7], 0
    %s11 = scalar_lea.sflag [#allocation7], 1
    %12 = vsyncpa %s11, 0
    loop: start=0, step=1, limit=4
    $region2: #{tpu_custom_call.1} parent=1 // loop_pre_header
      _
    $region3: #{tpu_custom_call.1} parent=1 // loop_header
      %s14 = sphi 0, %s18
      %p15 = scmp.ge.s32.totalorder %s14, 4
      %s21 = sphi 0, %s40
      %s22 = sphi 0, %s36
      %s23 = sphi 0, %s32
      %s24 = sphi 0, %s21
      %s25 = sphi 0, %s22
      %s26 = sphi 0, %s23
      %s27 = sphi 0, %s24
      %s28 = sphi 0, %s25
      %s29 = sphi 0, %s26
      %s47 = sphi 0, %s49
      %s50 = sphi 0, %s47
      %s51 = sphi 0, %s50
      %s67 = sphi 0, %s51
      %s77 = sphi 0, %s79
      %s80 = sphi 0, %s77
      %s81 = sphi 0, %s80
      %s97 = sphi 0, %s81
      %s103 = sphi 0, %s105
      %s106 = sphi 0, %s103
      %s107 = sphi 0, %s106
      %s123 = sphi 0, %s107
    $region4: #{tpu_custom_call.1} parent=1 // loop_header_branch
      %17 = sbr.rel (%p15) target = $region8
    $region5: #{tpu_custom_call.1} parent=1 // loop_body
      %s19 = ssub.s32 %s14, 1
      %s20 = ssub.s32 %s14, 2
      %s30 = sadd.s32 1, %s23
      %p31 = scmp.ge.s32.totalorder %s30, 1
      %s32 = scalar_select %p31, 0, %s30
      %s33 = sadd.s32 1, %s22
      %s34 = scalar_select %p31, %s33, %s22
      %p35 = scmp.ge.s32.totalorder %s34, 2
      %s36 = scalar_select %p35, 0, %s34
      %s37 = sadd.s32 1, %s21
      %s38 = scalar_select %p35, %s37, %s21
      %p39 = scmp.ge.s32.totalorder %s38, 1
      %s40 = scalar_select %p39, 0, %s38
      %s41 = sadd.s32 %s21, %s23
      %s42 = sadd.s32 %s40, %s32
      %s43 = ssub.s32 %s22, %s36
      %s44 = ssub.s32 %s41, %s42
      %s45 = sor.u32 %s43, %s44
      %p46 = scmp.eq.s32.totalorder %s45, 0
      %s48 = sadd.s32 %s47, 1
      %s49 = scalar_select %p46, %s47, %s48
      %p52 = pneg %p46
      %p53 = scmp.eq.s32.totalorder %s14, 1
      %p54 = por %p52, %p53
      %p55 = scmp.ne.s32.totalorder %s47, %s50
      %p56 = scmp.eq.s32.totalorder %s14, 0
      %p57 = por %p55, %p56
      %p58 = scmp.ne.s32.totalorder %s47, %s50
      %p59 = scmp.eq.s32.totalorder %s19, 1
      %p60 = por %p58, %p59
      %p61 = scmp.ne.s32.totalorder %s50, %s51
      %p62 = scmp.eq.s32.totalorder %s19, 0
      %p63 = por %p61, %p62
      %p64 = scmp.ne.s32.totalorder %s50, %s51
      %p65 = scmp.eq.s32.totalorder %s20, 1
      %p66 = por %p64, %p65
      %p68 = scmp.ne.s32.totalorder %s51, %s67
      %p69 = scmp.eq.s32.totalorder %s20, 0
      %p70 = por %p68, %p69
      %s71 = sadd.s32 %s21, %s23
      %s72 = sadd.s32 %s40, %s32
      %s73 = ssub.s32 %s22, %s36
      %s74 = ssub.s32 %s71, %s72
      %s75 = sor.u32 %s73, %s74
      %p76 = scmp.eq.s32.totalorder %s75, 0
      %s78 = sadd.s32 %s77, 1
      %s79 = scalar_select %p76, %s77, %s78
      %p82 = pneg %p76
      %p83 = scmp.eq.s32.totalorder %s14, 1
      %p84 = por %p82, %p83
      %p85 = scmp.ne.s32.totalorder %s77, %s80
      %p86 = scmp.eq.s32.totalorder %s14, 0
      %p87 = por %p85, %p86
      %p88 = scmp.ne.s32.totalorder %s77, %s80
      %p89 = scmp.eq.s32.totalorder %s19, 1
      %p90 = por %p88, %p89
      %p91 = scmp.ne.s32.totalorder %s80, %s81
      %p92 = scmp.eq.s32.totalorder %s19, 0
      %p93 = por %p91, %p92
      %p94 = scmp.ne.s32.totalorder %s80, %s81
      %p95 = scmp.eq.s32.totalorder %s20, 1
      %p96 = por %p94, %p95
      %p98 = scmp.ne.s32.totalorder %s81, %s97
      %p99 = scmp.eq.s32.totalorder %s20, 0
      %p100 = por %p98, %p99
      %s101 = ssub.s32 %s21, %s40
      %p102 = scmp.eq.s32.totalorder %s101, 0
      %s104 = sadd.s32 %s103, 1
      %s105 = scalar_select %p102, %s103, %s104
      %p108 = pneg %p102
      %p109 = scmp.eq.s32.totalorder %s14, 1
      %p110 = por %p108, %p109
      %p111 = scmp.ne.s32.totalorder %s103, %s106
      %p112 = scmp.eq.s32.totalorder %s14, 0
      %p113 = por %p111, %p112
      %p114 = scmp.ne.s32.totalorder %s103, %s106
      %p115 = scmp.eq.s32.totalorder %s19, 1
      %p116 = por %p114, %p115
      %p117 = scmp.ne.s32.totalorder %s106, %s107
      %p118 = scmp.eq.s32.totalorder %s19, 0
      %p119 = por %p117, %p118
      %p120 = scmp.ne.s32.totalorder %s106, %s107
      %p121 = scmp.eq.s32.totalorder %s20, 1
      %p122 = por %p120, %p121
      %p124 = scmp.ne.s32.totalorder %s107, %s123
      %p125 = scmp.eq.s32.totalorder %s20, 0
      %p126 = por %p124, %p125
      %p127 = scmp.le.s32.totalorder 1, %s14
      %p128 = scmp.lt.s32.totalorder %s14, 3
      %p129 = pnand %p127, %p128
      %p130 = pneg %p129
      // Predicated region
      $region9: #{tpu_custom_call.1} parent=5 // pred_check
        _
      $region10: #{tpu_custom_call.1} parent=5 // pred_check_branch
        %132 = sbr.rel (%p129) target = $region12
      $region11: #{tpu_custom_call.1} parent=5 // pred_region
        %s133 = ssub.s32 %s14, 1
      $region12: #{tpu_custom_call.1} parent=5 // pred_fallthru
        _
      %p134 = scmp.lt.s32.totalorder %s14, 2
      // Predicated region
      $region13: #{tpu_custom_call.1} parent=5 // pred_check
        %p135 = pneg %p134
      $region14: #{tpu_custom_call.1} parent=5 // pred_check_branch
        %137 = sbr.rel (%p135) target = $region16
      $region15: #{tpu_custom_call.1} parent=5 // pred_region
        // Predicated region
        $region17: #{tpu_custom_call.1} parent=15 // pred_check
          %p138 = pneg %p57
        $region18: #{tpu_custom_call.1} parent=15 // pred_check_branch
          %140 = sbr.rel (%p138) target = $region20
        $region19: #{tpu_custom_call.1} parent=15 // pred_region
          %s141 = sand.u32 %s47, 1
          %s142 = scalar_lea.sflag [#allocation5], %s141
          %s143 = sand.u32 %s47, 1
          %s144 = smul.addr %s143, 8
          %s145 = scalar_lea.vmem [#allocation4], %s144
          %s146 = sadd.s32 %s21, %s23
          %148 = vsyncadd %s142, 0
          %s149 = sadd.s32 %s146, %s22
          %s150 = smul.addr %s149, 8
          %s151 = scalar_lea.hbm %s0, %s150
          %s153 = sshll.u32 %s151, 4
          %s154 = int_to_ptr.hbm [resolvable:$true] %s153
          %s155 = sshll.u32 %s145, 4
          %s156 = int_to_ptr.vmem [resolvable:$true] %s155
          %158 = dma.hbm_to_vmem [thread:$0]  %s154, 128, %s156, %s142
        $region20: #{tpu_custom_call.1} parent=15 // pred_fallthru
          _
        // Predicated region
        $region21: #{tpu_custom_call.1} parent=15 // pred_check
          %p159 = pneg %p87
        $region22: #{tpu_custom_call.1} parent=15 // pred_check_branch
          %161 = sbr.rel (%p159) target = $region24
        $region23: #{tpu_custom_call.1} parent=15 // pred_region
          %s162 = sand.u32 %s77, 1
          %s163 = scalar_lea.sflag [#allocation7], %s162
          %s164 = sand.u32 %s77, 1
          %s165 = smul.addr %s164, 32
          %s166 = scalar_lea.vmem [#allocation6], %s165
          %s167 = sadd.s32 %s21, %s23
          %169 = vsyncadd %s163, 0
          %s170 = smul.addr %s22, 4
          %s171 = sadd.s32 %s167, %s170
          %s172 = smul.addr %s171, 8
          %s173 = scalar_lea.hbm %s1, %s172
          %s174 = sshll.u32 %s173, 4
          %s175 = int_to_ptr.hbm [resolvable:$true] %s174
          %s176 = sshll.u32 %s166, 4
          %s177 = int_to_ptr.vmem [resolvable:$true] %s176
          %182 = dma.hbm_to_vmem [thread:$0]  %s175, 512, %s177, %s163, 128, 128, 8
        $region24: #{tpu_custom_call.1} parent=15 // pred_fallthru
          _
      $region16: #{tpu_custom_call.1} parent=5 // pred_fallthru
        _
      %p183 = scmp.le.s32.totalorder 1, %s14
      %p184 = scmp.lt.s32.totalorder %s14, 3
      %p185 = pnand %p183, %p184
      %p186 = pneg %p185
      // Predicated region
      $region25: #{tpu_custom_call.1} parent=5 // pred_check
        _
      $region26: #{tpu_custom_call.1} parent=5 // pred_check_branch
        %188 = sbr.rel (%p185) target = $region28
      $region27: #{tpu_custom_call.1} parent=5 // pred_region
        %s189 = ssub.s32 %s14, 1
        %s190 = sand.u32 %s50, 1
        %s191 = scalar_lea.sflag [#allocation5], %s190
        %s192 = sand.u32 %s50, 1
        %s193 = smul.addr %s192, 8
        %s194 = scalar_lea.vmem [#allocation4], %s193
        // Predicated region
        $region29: #{tpu_custom_call.1} parent=27 // pred_check
          %p195 = pneg %p63
        $region30: #{tpu_custom_call.1} parent=27 // pred_check_branch
          %197 = sbr.rel (%p195) target = $region32
        $region31: #{tpu_custom_call.1} parent=27 // pred_region
          %199 = dma.done %s191, 128
        $region32: #{tpu_custom_call.1} parent=27 // pred_fallthru
          _
        %s200 = sand.u32 %s80, 1
        %s201 = scalar_lea.sflag [#allocation7], %s200
        %s202 = sand.u32 %s80, 1
        %s203 = smul.addr %s202, 32
        %s204 = scalar_lea.vmem [#allocation6], %s203
        // Predicated region
        $region33: #{tpu_custom_call.1} parent=27 // pred_check
          %p205 = pneg %p93
        $region34: #{tpu_custom_call.1} parent=27 // pred_check_branch
          %207 = sbr.rel (%p205) target = $region36
        $region35: #{tpu_custom_call.1} parent=27 // pred_region
          %209 = dma.done %s201, 512
        $region36: #{tpu_custom_call.1} parent=27 // pred_fallthru
          _
        %s210 = sand.u32 %s50, 1
        %s211 = scalar_lea.sflag [#allocation5], %s210
        %s212 = sand.u32 %s50, 1
        %s213 = smul.addr %s212, 8
        %s214 = scalar_lea.vmem [#allocation4], %s213
        %p215 = pneg %p63
        %p216 = pneg %p60
        %s217 = sand.u32 %s80, 1
        %s218 = scalar_lea.sflag [#allocation7], %s217
        %s219 = sand.u32 %s80, 1
        %s220 = smul.addr %s219, 32
        %s221 = scalar_lea.vmem [#allocation6], %s220
        %p222 = pneg %p93
        %p223 = pneg %p90
        %p224 = pneg %p119
        %p225 = pneg %p116
        %p226 = scmp.lt.s32.totalorder %s24, 0
        %s227 = scalar_select %p226, %s24, 0
        %s228 = smul.addr %s227, 4
        %s229 = smul.addr %s228, 8
        %s230 = scalar_lea.vmem %s2, %s229
        %s231 = sadd.s32 %s24, %s26
        %s232 = sadd.s32 %s24, %s26
        %p233 = scmp.lt.s32.totalorder %s24, 0
        %s234 = scalar_select %p233, %s24, 0
        %s235 = smul.addr %s234, 4
        %s236 = smul.addr %s235, 8
        %s237 = scalar_lea.vmem %s2, %s236
        %p238 = scmp.eq.s32.totalorder %s25, 0
        %p239 = scmp.eq.s32.totalorder %s26, 0
        %p240 = pnand %p238, %p239
        %p241 = pneg %p240
        // Predicated region
        $region37: #{tpu_custom_call.1} parent=27 // pred_check
          _
        $region38: #{tpu_custom_call.1} parent=27 // pred_check_branch
          %243 = sbr.rel (%p240) target = $region40
        $region39: #{tpu_custom_call.1} parent=27 // pred_region
          %vm244 = vcmask 261120
          %245 = vst.msk [vmem:[#allocation2] sm:$0xff] %vm244, 0.0
          %246 = vst.msk [vmem:[#allocation2 + $0x8] sm:$0xff] %vm244, 0.0
          %247 = vst.msk [vmem:[#allocation2 + $0x10] sm:$0xff] %vm244, 0.0
          %248 = vst.msk [vmem:[#allocation2 + $0x18] sm:$0xff] %vm244, 0.0
          %249 = vst.msk [vmem:[#allocation3] sm:$0xff] %vm244, 0.0
          %250 = vst.msk [vmem:[#allocation3 + $0x8] sm:$0xff] %vm244, 0.0
          %251 = vst.msk [vmem:[#allocation3 + $0x10] sm:$0xff] %vm244, 0.0
          %252 = vst.msk [vmem:[#allocation3 + $0x18] sm:$0xff] %vm244, 0.0
        $region40: #{tpu_custom_call.1} parent=27 // pred_fallthru
          _
        %v253 = vld [vmem:[%s204] sm:$0xff]
        %v254 = vld [vmem:[%s204 + $0x8] sm:$0xff]
        %v255 = vld [vmem:[%s204 + $0x10] sm:$0xff]
        %v256 = vld [vmem:[%s204 + $0x18] sm:$0xff]
        %v257 = vld [vmem:[%s194] sm:$0xff]
        %v258 = vlaneseq
        %v259 = vshrl.u32 %v258, 7
        %v260 = vmul.u32 %v257, 8
        %v261 = vadd.s32 %v260, %v259
        %v262 = vadd.s32 %v259, 8
        %v263 = vadd.s32 %v259, 16
        %v264 = vadd.s32 %v259, 24
        %vm265 = vcmp.eq.s32.totalorder %v261, %v259
        %vm266 = vcmp.eq.s32.totalorder %v261, %v262
        %vm267 = vcmp.eq.s32.totalorder %v261, %v263
        %vm268 = vcmp.eq.s32.totalorder %v261, %v264
        %v269 = vld [vmem:[#allocation2] sm:$0xff]
        %v270 = vld [vmem:[#allocation2 + $0x8] sm:$0xff]
        %v271 = vld [vmem:[#allocation2 + $0x10] sm:$0xff]
        %v272 = vld [vmem:[#allocation2 + $0x18] sm:$0xff]
        %v273 = vsel %vm265, %v253, 0.0
        %v274 = vsel %vm266, %v254, 0.0
        %v275 = vsel %vm267, %v255, 0.0
        %v276 = vsel %vm268, %v256, 0.0
        %v277 = vadd.f32 %v269, %v273
        %v278 = vadd.f32 %v270, %v274
        %v279 = vadd.f32 %v271, %v275
        %v280 = vadd.f32 %v272, %v276
        %vm281 = vcmask 261120
        %282 = vst.msk [vmem:[#allocation2] sm:$0xff] %vm281, %v277
        %283 = vst.msk [vmem:[#allocation2 + $0x8] sm:$0xff] %vm281, %v278
        %284 = vst.msk [vmem:[#allocation2 + $0x10] sm:$0xff] %vm281, %v279
        %285 = vst.msk [vmem:[#allocation2 + $0x18] sm:$0xff] %vm281, %v280
        %v286 = vld [vmem:[#allocation3] sm:$0xff]
        %v287 = vld [vmem:[#allocation3 + $0x8] sm:$0xff]
        %v288 = vld [vmem:[#allocation3 + $0x10] sm:$0xff]
        %v289 = vld [vmem:[#allocation3 + $0x18] sm:$0xff]
        %v290 = vmul.f32 %v253, %v253
        %v291 = vmul.f32 %v254, %v254
        %v292 = vmul.f32 %v255, %v255
        %v293 = vmul.f32 %v256, %v256
        %v294 = vsel %vm265, 1, 0
        %v295 = vsel %vm266, 1, 0
        %v296 = vsel %vm267, 1, 0
        %v297 = vsel %vm268, 1, 0
        %v298 = vcvt.s32.f32 %v294
        %v299 = vcvt.s32.f32 %v295
        %v300 = vcvt.s32.f32 %v296
        %v301 = vcvt.s32.f32 %v297
        %v302 = vadd.f32 %v290, %v298
        %v303 = vadd.f32 %v291, %v299
        %v304 = vadd.f32 %v292, %v300
        %v305 = vadd.f32 %v293, %v301
        %v306 = vadd.f32 %v286, %v302
        %v307 = vadd.f32 %v287, %v303
        %v308 = vadd.f32 %v288, %v304
        %v309 = vadd.f32 %v289, %v305
        %310 = vst.msk [vmem:[#allocation3] sm:$0xff] %vm281, %v306
        %311 = vst.msk [vmem:[#allocation3 + $0x8] sm:$0xff] %vm281, %v307
        %312 = vst.msk [vmem:[#allocation3 + $0x10] sm:$0xff] %vm281, %v308
        %313 = vst.msk [vmem:[#allocation3 + $0x18] sm:$0xff] %vm281, %v309
        %p314 = scmp.eq.s32.totalorder %s25, 1
        %p315 = pnand %p314, %p239
        %p316 = pneg %p315
        // Predicated region
        $region41: #{tpu_custom_call.1} parent=27 // pred_check
          _
        $region42: #{tpu_custom_call.1} parent=27 // pred_check_branch
          %318 = sbr.rel (%p315) target = $region44
        $region43: #{tpu_custom_call.1} parent=27 // pred_region
          %v319 = vld [vmem:[#allocation2] sm:$0xff]
          %v320 = vld [vmem:[#allocation2 + $0x8] sm:$0xff]
          %v321 = vld [vmem:[#allocation2 + $0x10] sm:$0xff]
          %v322 = vld [vmem:[#allocation2 + $0x18] sm:$0xff]
          %v323 = vsel %vm281, %v319, 0.0
          %324 = vadd.xlane.f32.xlu0 %v323
          %v325 = vpop.xlane.xlu0 %324
          %v326 = vsel %vm281, %v320, 0.0
          %327 = vadd.xlane.f32.xlu0 %v326
          %v328 = vpop.xlane.xlu0 %327
          %v329 = vsel %vm281, %v321, 0.0
          %330 = vadd.xlane.f32.xlu0 %v329
          %v331 = vpop.xlane.xlu0 %330
          %v332 = vsel %vm281, %v322, 0.0
          %333 = vadd.xlane.f32.xlu0 %v332
          %v334 = vpop.xlane.xlu0 %333
          %v335 = vld [vmem:[#allocation3] sm:$0xff]
          %v336 = vld [vmem:[#allocation3 + $0x8] sm:$0xff]
          %v337 = vld [vmem:[#allocation3 + $0x10] sm:$0xff]
          %v338 = vld [vmem:[#allocation3 + $0x18] sm:$0xff]
          %v339 = vsel %vm281, %v335, 0.0
          %340 = vadd.xlane.f32.xlu0 %v339
          %v341 = vpop.xlane.xlu0 %340
          %v342 = vsel %vm281, %v336, 0.0
          %343 = vadd.xlane.f32.xlu0 %v342
          %v344 = vpop.xlane.xlu0 %343
          %v345 = vsel %vm281, %v337, 0.0
          %346 = vadd.xlane.f32.xlu0 %v345
          %v347 = vpop.xlane.xlu0 %346
          %v348 = vsel %vm281, %v338, 0.0
          %349 = vadd.xlane.f32.xlu0 %v348
          %v350 = vpop.xlane.xlu0 %349
          %vm351 = vcmask 7168
          %v352 = vsel %vm351, %v325, %v341
          %v353 = vsel %vm351, %v328, %v344
          %v354 = vsel %vm351, %v331, %v347
          %v355 = vsel %vm351, %v334, %v350
          %vm356 = vcmask 15360
          %357 = vst.msk [vmem:[%s237] sm:$0xff] %vm356, %v352
          %358 = vst.msk [vmem:[%s237 + $0x8] sm:$0xff] %vm356, %v353
          %359 = vst.msk [vmem:[%s237 + $0x10] sm:$0xff] %vm356, %v354
          %360 = vst.msk [vmem:[%s237 + $0x18] sm:$0xff] %vm356, %v355
        $region44: #{tpu_custom_call.1} parent=27 // pred_fallthru
          _
        %p361 = scmp.lt.s32.totalorder %s24, 0
        %s362 = scalar_select %p361, %s24, 0
        %s363 = smul.addr %s362, 4
        %s364 = smul.addr %s363, 8
        %s365 = scalar_lea.vmem %s2, %s364
        // Predicated region
        $region45: #{tpu_custom_call.1} parent=27 // pred_check
          %p366 = pneg %p116
        $region46: #{tpu_custom_call.1} parent=27 // pred_check_branch
          %368 = sbr.rel (%p366) target = $region48
        $region47: #{tpu_custom_call.1} parent=27 // pred_region
          _
        $region48: #{tpu_custom_call.1} parent=27 // pred_fallthru
          _
        // Predicated region
        $region49: #{tpu_custom_call.1} parent=27 // pred_check
          %p369 = pneg %p116
        $region50: #{tpu_custom_call.1} parent=27 // pred_check_branch
          %371 = sbr.rel (%p369) target = $region52
        $region51: #{tpu_custom_call.1} parent=27 // pred_region
          %p372 = scmp.lt.s32.totalorder %s24, 0
          %s373 = scalar_select %p372, %s24, 0
          %s374 = smul.addr %s373, 4
          %s375 = smul.addr %s374, 8
          %s376 = scalar_lea.vmem %s2, %s375
        $region52: #{tpu_custom_call.1} parent=27 // pred_fallthru
          _
      $region28: #{tpu_custom_call.1} parent=5 // pred_fallthru
        _
      %p377 = scmp.le.s32.totalorder 2, %s14
      // Predicated region
      $region53: #{tpu_custom_call.1} parent=5 // pred_check
        %p378 = pneg %p377
      $region54: #{tpu_custom_call.1} parent=5 // pred_check_branch
        %380 = sbr.rel (%p378) target = $region56
      $region55: #{tpu_custom_call.1} parent=5 // pred_region
        %s381 = ssub.s32 %s14, 2
      $region56: #{tpu_custom_call.1} parent=5 // pred_fallthru
        _
    $region6: #{tpu_custom_call.1} parent=1 // loop_footer
      %s18 = sadd.s32 1, %s14
    $region7: #{tpu_custom_call.1} parent=1 // loop_footer_branch
      %13 = sbr.rel target = $region3
    $region8: #{tpu_custom_call.1} parent=1 // loop_exit
      _
    %382 = vsyncpa [#allocation5], 1
    %s383 = scalar_lea.sflag [#allocation5], 1
    %384 = vsyncpa %s383, 1
    %385 = vsyncpa [#allocation7], 1
    %s386 = scalar_lea.sflag [#allocation7], 1
    %387 = vsyncpa %s386, 1

</llo_original>
